<compile_context>
chip_gen: v7x
topology: tpu7x:2x2x1
jax: 0.10.0
libtpu: 0.0.40
codegen_flags: <defaults>
</compile_context>

<pallas_src>
import functools

import jax
import jax.numpy as jnp
import numpy as np
from jax import lax
from jax.experimental import pallas as pl
from jax.experimental.pallas import tpu as pltpu

QUERY_MASK = 1337

# Feature-lane base offsets for the 9 categorical index columns, packed as
# [ s0(3) s1(3) s2(3) r(4) | p(6) | s'0(3) s'1(3) s'2(3) r'(4) ]  -> 32 lanes.
_GROUP_OFFSETS = (0, 3, 6, 9, 13, 19, 22, 25, 28)
_NUM_FEATS = 32        # one-hot lanes per logical row
_ROWPACK = 4           # logical rows packed per physical row (4*32 = 128 lanes)
_FLAG_BIT = 27         # query-row flag bit in the packed int32


# ----------------------------- Pallas kernel ------------------------------ #
def _alchemy_kernel(idx_ref, w_ref, pe_ref, out_ref):
    width = w_ref.shape[1]              # _ROWPACK * three_dim (lane-dense)
    three_dim = width // _ROWPACK
    dim_ = three_dim // 3

    idx = idx_ref[...]                  # [tm4, 4] int32, bit-packed rows

    feat_iota = lax.broadcasted_iota(jnp.int32, (1, _ROWPACK * _NUM_FEATS), 1)
    out_iota = lax.broadcasted_iota(jnp.int32, (1, width), 1)

    hot = None      # [tm4, 128] bool one-hot block (OR-accumulated)
    qmask = None    # [tm4, width] bool query-substitution mask
    for s in range(_ROWPACK):
        word = idx[:, s:s + 1]                                   # [tm4, 1]
        for c, lo in enumerate(_GROUP_OFFSETS):
            v = ((word >> (3 * c)) & 7) + (lo + s * _NUM_FEATS)
            h = v == feat_iota
            hot = h if hot is None else jnp.logical_or(hot, h)
        flag = ((word >> _FLAG_BIT) & 1) == 1                    # [tm4, 1]
        in_blk = jnp.logical_and(out_iota >= s * three_dim + 2 * dim_,
                                 out_iota < (s + 1) * three_dim)
        m = jnp.logical_and(flag, in_blk)
        qmask = m if qmask is None else jnp.logical_or(qmask, m)

    feat = hot.astype(jnp.float32)                               # cast ONCE

    # One fused 4x block-diagonal matmul + packed positional-embedding bias.
    out = jnp.dot(feat, w_ref[...], preferred_element_type=jnp.float32)
    out = out + pe_ref[0:1, :]

    # Query-row substitution (last third of each sub-row) as one full select.
    out = jnp.where(qmask, pe_ref[1:2, :], out)

    out_ref[...] = out                  # one lane-dense full-width store


# ------------------------------- Wrapper ---------------------------------- #
@functools.partial(jax.jit, static_argnames=("return_query_idx", "tile_m"))
def alchemy_embedding(batch, params, return_query_idx=False, tile_m=8192):
    stone_w, pot_w, start_pe, pot_pe, end_pe, query_e = params
    N, L, _ = batch.shape
    dim_ = stone_w.shape[1]
    three_dim = 3 * dim_
    width = _ROWPACK * three_dim
    M = N * L

    # ---- query detection (exact PyTorch argmax semantics, no scatter) ----
    batch = batch.astype(jnp.int32)
    is_query = jnp.all(batch[:, :, -4:] == QUERY_MASK, axis=-1)       # [N, L]
    query_idx = jnp.argmax(is_query.astype(jnp.int32), axis=-1)       # [N]
    qflag = (jnp.arange(L)[None, :] == query_idx[:, None]).astype(jnp.int32)

    # ---- bit-pack 9 indices (3 bits each) + flag into one int32 per row ----
    packed = qflag << _FLAG_BIT
    for c in range(9):
        packed = packed | ((batch[:, :, c] & 7) << (3 * c))
    packed = packed.reshape(M)

    # ---- packed 4x block-diagonal weight + tiled PE table ----
    w_small = jnp.zeros((_NUM_FEATS, three_dim), jnp.float32)
    w_small = w_small.at[0:13, 0:dim_].set(stone_w)
    w_small = w_small.at[13:19, dim_:2 * dim_].set(pot_w)
    w_small = w_small.at[19:32, 2 * dim_:3 * dim_].set(stone_w)
    w_packed = jnp.zeros((_ROWPACK * _NUM_FEATS, width), jnp.float32)
    for s in range(_ROWPACK):
        w_packed = w_packed.at[s * _NUM_FEATS:(s + 1) * _NUM_FEATS,
                               s * three_dim:(s + 1) * three_dim].set(w_small)

    pe_row = jnp.concatenate([start_pe, pot_pe, end_pe])              # bias
    pe_q = jnp.concatenate([jnp.zeros((2 * dim_,), jnp.float32),
                            query_e + end_pe])                        # query sub
    pe_packed = jnp.stack([jnp.tile(pe_row, _ROWPACK),
                           jnp.tile(pe_q, _ROWPACK)], axis=0)         # [2, width]

    # ---- row tiling: tm multiple of 32 (8 sublanes x 4 packed rows) ----
    align = _ROWPACK * 8
    m_ceil = ((M + align - 1) // align) * align
    tm = min(int(tile_m), m_ceil)
    if m_ceil >= 2 * align:                       # keep >= 2 grid steps so
        tm = min(tm, ((m_ceil // 2 + align - 1) // align) * align)  # megacore splits
    tm = max(align, (tm // align) * align)
    m_pad = pl.cdiv(M, tm) * tm
    if m_pad != M:
        packed = jnp.pad(packed, (0, m_pad - M))
    idx4 = packed.reshape(m_pad // _ROWPACK, _ROWPACK)   # free reshape
    tm4 = tm // _ROWPACK
    m4_pad = m_pad // _ROWPACK
    grid = (m_pad // tm,)

    cost = pl.CostEstimate(
        flops=2 * m4_pad * (_ROWPACK * _NUM_FEATS) * width,
        transcendentals=0,
        bytes_accessed=(m4_pad * _ROWPACK * 4
                        + _ROWPACK * _NUM_FEATS * width * 4
                        + 2 * width * 4
                        + m4_pad * width * 4))

    out = pl.pallas_call(
        _alchemy_kernel,
        out_shape=jax.ShapeDtypeStruct((m4_pad, width), jnp.float32),
        grid=grid,
        in_specs=[
            pl.BlockSpec((tm4, _ROWPACK), lambda i: (i, 0)),          # packed idx
            pl.BlockSpec((_ROWPACK * _NUM_FEATS, width), lambda i: (0, 0)),
            pl.BlockSpec((2, width), lambda i: (0, 0)),               # PE table
        ],
        out_specs=pl.BlockSpec((tm4, width), lambda i: (i, 0)),
        compiler_params=pltpu.CompilerParams(
            dimension_semantics=("parallel",),        # megacore / v7x 2-TC split
            vmem_limit_bytes=48 * 1024 * 1024),
        cost_estimate=cost,
    )(idx4, w_packed, pe_packed)

    # Free reshapes: [m4, 4*3d] -> [m_pad, 3d] -> [N, L, 3d].
    out = out.reshape(m_pad, three_dim)[:M].reshape(N, L, three_dim)
    if return_query_idx:
        return out, query_idx
    return out


# ------------------ Pure-JAX reference (PyTorch translation) ---------------- #
def alchemy_embedding_ref(batch, params):
    stone_w, pot_w, start_pe, pot_pe, end_pe, query_e = params
    N, L, _ = batch.shape
    batch = batch.astype(jnp.int32)
    is_q = jnp.all(batch[:, :, -4:] == QUERY_MASK, axis=-1)
    query_idx = jnp.argmax(is_q.astype(jnp.int32), axis=-1)
    batch = batch.at[jnp.arange(N), query_idx, -4:].set(0)
    s, r, p, s2, r2 = (batch[..., 0:3], batch[..., 3:4], batch[..., 4:5],
                       batch[..., 5:8], batch[..., 8:9])
    oh = lambda x, n: jax.nn.one_hot(x, n, dtype=jnp.float32).reshape(N, L, -1)
    fs = jnp.concatenate([oh(s, 3), oh(r, 4)], axis=-1)
    fp = oh(p, 6)
    fs2 = jnp.concatenate([oh(s2, 3), oh(r2, 4)], axis=-1)
    e_s = fs @ stone_w + start_pe
    e_p = fp @ pot_w + pot_pe
    e_s2 = fs2 @ stone_w + end_pe
    e_s2 = e_s2.at[jnp.arange(N), query_idx].set(query_e + end_pe)
    return jnp.concatenate([e_s, e_p, e_s2], axis=-1), query_idx


# --------------------------------- Main ------------------------------------ #
def _make_batch(key, N, L, q_rows):
    keys = jax.random.split(key, 5)
    s_idx = jax.random.randint(keys[0], (N, L, 3), 0, 3)
    r_idx = jax.random.randint(keys[1], (N, L, 1), 0, 4)
    p_idx = jax.random.randint(keys[2], (N, L, 1), 0, 6)
    s2_idx = jax.random.randint(keys[3], (N, L, 3), 0, 3)
    r2_idx = jax.random.randint(keys[4], (N, L, 1), 0, 4)
    batch = jnp.concatenate([s_idx, r_idx, p_idx, s2_idx, r2_idx],
                            axis=-1).astype(jnp.int32)
    batch = batch.at[jnp.arange(N), q_rows, 5:9].set(QUERY_MASK)
    return batch


if __name__ == "__main__":
    dim = 96
    assert dim % 3 == 0
    dim_ = dim // 3

    key = jax.random.PRNGKey(0)
    keys = jax.random.split(key, 8)

    stone_w = jax.random.uniform(keys[0], (13, dim_), jnp.float32, -0.3, 0.3)
    pot_w = jax.random.uniform(keys[1], (6, dim_), jnp.float32, -0.3, 0.3)
    start_pe = jax.random.uniform(keys[2], (dim_,), jnp.float32)
    pot_pe = jax.random.uniform(keys[3], (dim_,), jnp.float32)
    end_pe = jax.random.uniform(keys[4], (dim_,), jnp.float32)
    query_e = jax.random.uniform(keys[5], (dim_,), jnp.float32)
    params = (stone_w, pot_w, start_pe, pot_pe, end_pe, query_e)

    # Test 1: small batch, single grid step, default tile.
    N1, L1 = 2, 8
    batch1 = _make_batch(keys[6], N1, L1, jnp.array([5, 3], dtype=jnp.int32))
    out1, qidx1 = alchemy_embedding(batch1, params, return_query_idx=True)
    out1 = jax.block_until_ready(out1)
    ref1, ref_qidx1 = alchemy_embedding_ref(batch1, params)
    np.testing.assert_allclose(np.asarray(out1), np.asarray(ref1),
                               rtol=1e-5, atol=1e-5)
    np.testing.assert_array_equal(np.asarray(qidx1), np.asarray(ref_qidx1))

    # Test 2: multi-step pipelined grid + row padding (M=150, tile_m=64).
    N2, L2 = 3, 50
    batch2 = _make_batch(keys[7], N2, L2,
                         jnp.array([49, 0, 17], dtype=jnp.int32))
    out2 = alchemy_embedding(batch2, params, tile_m=64)
    out2 = jax.block_until_ready(out2)
    ref2, _ = alchemy_embedding_ref(batch2, params)
    np.testing.assert_allclose(np.asarray(out2), np.asarray(ref2),
                               rtol=1e-5, atol=1e-5)

    # Test 3: non-multiple-of-32 tile_m is rounded down safely (40 -> 32).
    out3 = alchemy_embedding(batch2, params, tile_m=40)
    out3 = jax.block_until_ready(out3)
    np.testing.assert_allclose(np.asarray(out3), np.asarray(ref2),
                               rtol=1e-5, atol=1e-5)

    print("KERNEL_OK")
</pallas_src>

<mosaic_0001>
module attributes {stable_mosaic.version = 11 : i64} {
  func.func @_alchemy_kernel(%arg0: i32, %arg1: memref<8x4xi32, #tpu.memory_space<vmem>>, %arg2: memref<128x384xf32, #tpu.memory_space<vmem>>, %arg3: memref<2x384xf32, #tpu.memory_space<vmem>>, %arg4: memref<8x384xf32, #tpu.memory_space<vmem>>) attributes {dimension_semantics = [#tpu.dimension_semantics<parallel>], iteration_bounds = array<i64: 1>, scalar_prefetch = 0 : i64, scratch_operands = 0 : i64, tpu.core_type = #tpu.core_type<tc>, window_params = [{transform_indices = @transform_0, window_bounds = array<i64: 8, 4>}, {pipeline_mode = #tpu.pipeline_mode<synchronous>, transform_indices = @transform_1, window_bounds = array<i64: 128, 384>}, {pipeline_mode = #tpu.pipeline_mode<synchronous>, transform_indices = @transform_2, window_bounds = array<i64: 2, 384>}, {transform_indices = @transform_3, window_bounds = array<i64: 8, 384>}]} {
    %c0 = arith.constant 0 : index
    %c0_0 = arith.constant 0 : index
    %0 = vector.load %arg1[%c0, %c0_0] : memref<8x4xi32, #tpu.memory_space<vmem>>, vector<8x4xi32>
    %1 = tpu.iota {dimensions = array<i32: 1>} : vector<1x128xi32>
    %2 = tpu.iota {dimensions = array<i32: 1>} : vector<1x384xi32>
    %3 = vector.extract_strided_slice %0 {offsets = [0, 0], sizes = [8, 1], strides = [1, 1]} : vector<8x4xi32> to vector<8x1xi32>
    %c0_i32 = arith.constant 0 : i32
    %4 = vector.broadcast %c0_i32 : i32 to vector<8x1xi32>
    %5 = arith.shrsi %3, %4 : vector<8x1xi32>
    %c7_i32 = arith.constant 7 : i32
    %6 = vector.broadcast %c7_i32 : i32 to vector<8x1xi32>
    %7 = arith.andi %5, %6 : vector<8x1xi32>
    %c0_i32_1 = arith.constant 0 : i32
    %8 = vector.broadcast %c0_i32_1 : i32 to vector<8x1xi32>
    %9 = arith.addi %7, %8 : vector<8x1xi32>
    %10 = vector.broadcast %9 : vector<8x1xi32> to vector<8x128xi32>
    %11 = vector.broadcast %1 : vector<1x128xi32> to vector<8x128xi32>
    %12 = arith.cmpi eq, %10, %11 : vector<8x128xi32>
    %c3_i32 = arith.constant 3 : i32
    %13 = vector.broadcast %c3_i32 : i32 to vector<8x1xi32>
    %14 = arith.shrsi %3, %13 : vector<8x1xi32>
    %c7_i32_2 = arith.constant 7 : i32
    %15 = vector.broadcast %c7_i32_2 : i32 to vector<8x1xi32>
    %16 = arith.andi %14, %15 : vector<8x1xi32>
    %c3_i32_3 = arith.constant 3 : i32
    %17 = vector.broadcast %c3_i32_3 : i32 to vector<8x1xi32>
    %18 = arith.addi %16, %17 : vector<8x1xi32>
    %19 = vector.broadcast %18 : vector<8x1xi32> to vector<8x128xi32>
    %20 = vector.broadcast %1 : vector<1x128xi32> to vector<8x128xi32>
    %21 = arith.cmpi eq, %19, %20 : vector<8x128xi32>
    %22 = arith.ori %12, %21 : vector<8x128xi1>
    %c6_i32 = arith.constant 6 : i32
    %23 = vector.broadcast %c6_i32 : i32 to vector<8x1xi32>
    %24 = arith.shrsi %3, %23 : vector<8x1xi32>
    %c7_i32_4 = arith.constant 7 : i32
    %25 = vector.broadcast %c7_i32_4 : i32 to vector<8x1xi32>
    %26 = arith.andi %24, %25 : vector<8x1xi32>
    %c6_i32_5 = arith.constant 6 : i32
    %27 = vector.broadcast %c6_i32_5 : i32 to vector<8x1xi32>
    %28 = arith.addi %26, %27 : vector<8x1xi32>
    %29 = vector.broadcast %28 : vector<8x1xi32> to vector<8x128xi32>
    %30 = vector.broadcast %1 : vector<1x128xi32> to vector<8x128xi32>
    %31 = arith.cmpi eq, %29, %30 : vector<8x128xi32>
    %32 = arith.ori %22, %31 : vector<8x128xi1>
    %c9_i32 = arith.constant 9 : i32
    %33 = vector.broadcast %c9_i32 : i32 to vector<8x1xi32>
    %34 = arith.shrsi %3, %33 : vector<8x1xi32>
    %c7_i32_6 = arith.constant 7 : i32
    %35 = vector.broadcast %c7_i32_6 : i32 to vector<8x1xi32>
    %36 = arith.andi %34, %35 : vector<8x1xi32>
    %c9_i32_7 = arith.constant 9 : i32
    %37 = vector.broadcast %c9_i32_7 : i32 to vector<8x1xi32>
    %38 = arith.addi %36, %37 : vector<8x1xi32>
    %39 = vector.broadcast %38 : vector<8x1xi32> to vector<8x128xi32>
    %40 = vector.broadcast %1 : vector<1x128xi32> to vector<8x128xi32>
    %41 = arith.cmpi eq, %39, %40 : vector<8x128xi32>
    %42 = arith.ori %32, %41 : vector<8x128xi1>
    %c12_i32 = arith.constant 12 : i32
    %43 = vector.broadcast %c12_i32 : i32 to vector<8x1xi32>
    %44 = arith.shrsi %3, %43 : vector<8x1xi32>
    %c7_i32_8 = arith.constant 7 : i32
    %45 = vector.broadcast %c7_i32_8 : i32 to vector<8x1xi32>
    %46 = arith.andi %44, %45 : vector<8x1xi32>
    %c13_i32 = arith.constant 13 : i32
    %47 = vector.broadcast %c13_i32 : i32 to vector<8x1xi32>
    %48 = arith.addi %46, %47 : vector<8x1xi32>
    %49 = vector.broadcast %48 : vector<8x1xi32> to vector<8x128xi32>
    %50 = vector.broadcast %1 : vector<1x128xi32> to vector<8x128xi32>
    %51 = arith.cmpi eq, %49, %50 : vector<8x128xi32>
    %52 = arith.ori %42, %51 : vector<8x128xi1>
    %c15_i32 = arith.constant 15 : i32
    %53 = vector.broadcast %c15_i32 : i32 to vector<8x1xi32>
    %54 = arith.shrsi %3, %53 : vector<8x1xi32>
    %c7_i32_9 = arith.constant 7 : i32
    %55 = vector.broadcast %c7_i32_9 : i32 to vector<8x1xi32>
    %56 = arith.andi %54, %55 : vector<8x1xi32>
    %c19_i32 = arith.constant 19 : i32
    %57 = vector.broadcast %c19_i32 : i32 to vector<8x1xi32>
    %58 = arith.addi %56, %57 : vector<8x1xi32>
    %59 = vector.broadcast %58 : vector<8x1xi32> to vector<8x128xi32>
    %60 = vector.broadcast %1 : vector<1x128xi32> to vector<8x128xi32>
    %61 = arith.cmpi eq, %59, %60 : vector<8x128xi32>
    %62 = arith.ori %52, %61 : vector<8x128xi1>
    %c18_i32 = arith.constant 18 : i32
    %63 = vector.broadcast %c18_i32 : i32 to vector<8x1xi32>
    %64 = arith.shrsi %3, %63 : vector<8x1xi32>
    %c7_i32_10 = arith.constant 7 : i32
    %65 = vector.broadcast %c7_i32_10 : i32 to vector<8x1xi32>
    %66 = arith.andi %64, %65 : vector<8x1xi32>
    %c22_i32 = arith.constant 22 : i32
    %67 = vector.broadcast %c22_i32 : i32 to vector<8x1xi32>
    %68 = arith.addi %66, %67 : vector<8x1xi32>
    %69 = vector.broadcast %68 : vector<8x1xi32> to vector<8x128xi32>
    %70 = vector.broadcast %1 : vector<1x128xi32> to vector<8x128xi32>
    %71 = arith.cmpi eq, %69, %70 : vector<8x128xi32>
    %72 = arith.ori %62, %71 : vector<8x128xi1>
    %c21_i32 = arith.constant 21 : i32
    %73 = vector.broadcast %c21_i32 : i32 to vector<8x1xi32>
    %74 = arith.shrsi %3, %73 : vector<8x1xi32>
    %c7_i32_11 = arith.constant 7 : i32
    %75 = vector.broadcast %c7_i32_11 : i32 to vector<8x1xi32>
    %76 = arith.andi %74, %75 : vector<8x1xi32>
    %c25_i32 = arith.constant 25 : i32
    %77 = vector.broadcast %c25_i32 : i32 to vector<8x1xi32>
    %78 = arith.addi %76, %77 : vector<8x1xi32>
    %79 = vector.broadcast %78 : vector<8x1xi32> to vector<8x128xi32>
    %80 = vector.broadcast %1 : vector<1x128xi32> to vector<8x128xi32>
    %81 = arith.cmpi eq, %79, %80 : vector<8x128xi32>
    %82 = arith.ori %72, %81 : vector<8x128xi1>
    %c24_i32 = arith.constant 24 : i32
    %83 = vector.broadcast %c24_i32 : i32 to vector<8x1xi32>
    %84 = arith.shrsi %3, %83 : vector<8x1xi32>
    %c7_i32_12 = arith.constant 7 : i32
    %85 = vector.broadcast %c7_i32_12 : i32 to vector<8x1xi32>
    %86 = arith.andi %84, %85 : vector<8x1xi32>
    %c28_i32 = arith.constant 28 : i32
    %87 = vector.broadcast %c28_i32 : i32 to vector<8x1xi32>
    %88 = arith.addi %86, %87 : vector<8x1xi32>
    %89 = vector.broadcast %88 : vector<8x1xi32> to vector<8x128xi32>
    %90 = vector.broadcast %1 : vector<1x128xi32> to vector<8x128xi32>
    %91 = arith.cmpi eq, %89, %90 : vector<8x128xi32>
    %92 = arith.ori %82, %91 : vector<8x128xi1>
    %c27_i32 = arith.constant 27 : i32
    %93 = vector.broadcast %c27_i32 : i32 to vector<8x1xi32>
    %94 = arith.shrsi %3, %93 : vector<8x1xi32>
    %c1_i32 = arith.constant 1 : i32
    %95 = vector.broadcast %c1_i32 : i32 to vector<8x1xi32>
    %96 = arith.andi %94, %95 : vector<8x1xi32>
    %c1_i32_13 = arith.constant 1 : i32
    %97 = vector.broadcast %c1_i32_13 : i32 to vector<8x1xi32>
    %98 = arith.cmpi eq, %96, %97 : vector<8x1xi32>
    %c64_i32 = arith.constant 64 : i32
    %99 = vector.broadcast %c64_i32 : i32 to vector<1x384xi32>
    %100 = arith.cmpi sge, %2, %99 : vector<1x384xi32>
    %c96_i32 = arith.constant 96 : i32
    %101 = vector.broadcast %c96_i32 : i32 to vector<1x384xi32>
    %102 = arith.cmpi slt, %2, %101 : vector<1x384xi32>
    %103 = arith.andi %100, %102 : vector<1x384xi1>
    %104 = vector.broadcast %98 : vector<8x1xi1> to vector<8x384xi1>
    %105 = vector.broadcast %103 : vector<1x384xi1> to vector<8x384xi1>
    %106 = arith.andi %104, %105 : vector<8x384xi1>
    %107 = vector.extract_strided_slice %0 {offsets = [0, 1], sizes = [8, 1], strides = [1, 1]} : vector<8x4xi32> to vector<8x1xi32>
    %c0_i32_14 = arith.constant 0 : i32
    %108 = vector.broadcast %c0_i32_14 : i32 to vector<8x1xi32>
    %109 = arith.shrsi %107, %108 : vector<8x1xi32>
    %c7_i32_15 = arith.constant 7 : i32
    %110 = vector.broadcast %c7_i32_15 : i32 to vector<8x1xi32>
    %111 = arith.andi %109, %110 : vector<8x1xi32>
    %c32_i32 = arith.constant 32 : i32
    %112 = vector.broadcast %c32_i32 : i32 to vector<8x1xi32>
    %113 = arith.addi %111, %112 : vector<8x1xi32>
    %114 = vector.broadcast %113 : vector<8x1xi32> to vector<8x128xi32>
    %115 = vector.broadcast %1 : vector<1x128xi32> to vector<8x128xi32>
    %116 = arith.cmpi eq, %114, %115 : vector<8x128xi32>
    %117 = arith.ori %92, %116 : vector<8x128xi1>
    %c3_i32_16 = arith.constant 3 : i32
    %118 = vector.broadcast %c3_i32_16 : i32 to vector<8x1xi32>
    %119 = arith.shrsi %107, %118 : vector<8x1xi32>
    %c7_i32_17 = arith.constant 7 : i32
    %120 = vector.broadcast %c7_i32_17 : i32 to vector<8x1xi32>
    %121 = arith.andi %119, %120 : vector<8x1xi32>
    %c35_i32 = arith.constant 35 : i32
    %122 = vector.broadcast %c35_i32 : i32 to vector<8x1xi32>
    %123 = arith.addi %121, %122 : vector<8x1xi32>
    %124 = vector.broadcast %123 : vector<8x1xi32> to vector<8x128xi32>
    %125 = vector.broadcast %1 : vector<1x128xi32> to vector<8x128xi32>
    %126 = arith.cmpi eq, %124, %125 : vector<8x128xi32>
    %127 = arith.ori %117, %126 : vector<8x128xi1>
    %c6_i32_18 = arith.constant 6 : i32
    %128 = vector.broadcast %c6_i32_18 : i32 to vector<8x1xi32>
    %129 = arith.shrsi %107, %128 : vector<8x1xi32>
    %c7_i32_19 = arith.constant 7 : i32
    %130 = vector.broadcast %c7_i32_19 : i32 to vector<8x1xi32>
    %131 = arith.andi %129, %130 : vector<8x1xi32>
    %c38_i32 = arith.constant 38 : i32
    %132 = vector.broadcast %c38_i32 : i32 to vector<8x1xi32>
    %133 = arith.addi %131, %132 : vector<8x1xi32>
    %134 = vector.broadcast %133 : vector<8x1xi32> to vector<8x128xi32>
    %135 = vector.broadcast %1 : vector<1x128xi32> to vector<8x128xi32>
    %136 = arith.cmpi eq, %134, %135 : vector<8x128xi32>
    %137 = arith.ori %127, %136 : vector<8x128xi1>
    %c9_i32_20 = arith.constant 9 : i32
    %138 = vector.broadcast %c9_i32_20 : i32 to vector<8x1xi32>
    %139 = arith.shrsi %107, %138 : vector<8x1xi32>
    %c7_i32_21 = arith.constant 7 : i32
    %140 = vector.broadcast %c7_i32_21 : i32 to vector<8x1xi32>
    %141 = arith.andi %139, %140 : vector<8x1xi32>
    %c41_i32 = arith.constant 41 : i32
    %142 = vector.broadcast %c41_i32 : i32 to vector<8x1xi32>
    %143 = arith.addi %141, %142 : vector<8x1xi32>
    %144 = vector.broadcast %143 : vector<8x1xi32> to vector<8x128xi32>
    %145 = vector.broadcast %1 : vector<1x128xi32> to vector<8x128xi32>
    %146 = arith.cmpi eq, %144, %145 : vector<8x128xi32>
    %147 = arith.ori %137, %146 : vector<8x128xi1>
    %c12_i32_22 = arith.constant 12 : i32
    %148 = vector.broadcast %c12_i32_22 : i32 to vector<8x1xi32>
    %149 = arith.shrsi %107, %148 : vector<8x1xi32>
    %c7_i32_23 = arith.constant 7 : i32
    %150 = vector.broadcast %c7_i32_23 : i32 to vector<8x1xi32>
    %151 = arith.andi %149, %150 : vector<8x1xi32>
    %c45_i32 = arith.constant 45 : i32
    %152 = vector.broadcast %c45_i32 : i32 to vector<8x1xi32>
    %153 = arith.addi %151, %152 : vector<8x1xi32>
    %154 = vector.broadcast %153 : vector<8x1xi32> to vector<8x128xi32>
    %155 = vector.broadcast %1 : vector<1x128xi32> to vector<8x128xi32>
    %156 = arith.cmpi eq, %154, %155 : vector<8x128xi32>
    %157 = arith.ori %147, %156 : vector<8x128xi1>
    %c15_i32_24 = arith.constant 15 : i32
    %158 = vector.broadcast %c15_i32_24 : i32 to vector<8x1xi32>
    %159 = arith.shrsi %107, %158 : vector<8x1xi32>
    %c7_i32_25 = arith.constant 7 : i32
    %160 = vector.broadcast %c7_i32_25 : i32 to vector<8x1xi32>
    %161 = arith.andi %159, %160 : vector<8x1xi32>
    %c51_i32 = arith.constant 51 : i32
    %162 = vector.broadcast %c51_i32 : i32 to vector<8x1xi32>
    %163 = arith.addi %161, %162 : vector<8x1xi32>
    %164 = vector.broadcast %163 : vector<8x1xi32> to vector<8x128xi32>
    %165 = vector.broadcast %1 : vector<1x128xi32> to vector<8x128xi32>
    %166 = arith.cmpi eq, %164, %165 : vector<8x128xi32>
    %167 = arith.ori %157, %166 : vector<8x128xi1>
    %c18_i32_26 = arith.constant 18 : i32
    %168 = vector.broadcast %c18_i32_26 : i32 to vector<8x1xi32>
    %169 = arith.shrsi %107, %168 : vector<8x1xi32>
    %c7_i32_27 = arith.constant 7 : i32
    %170 = vector.broadcast %c7_i32_27 : i32 to vector<8x1xi32>
    %171 = arith.andi %169, %170 : vector<8x1xi32>
    %c54_i32 = arith.constant 54 : i32
    %172 = vector.broadcast %c54_i32 : i32 to vector<8x1xi32>
    %173 = arith.addi %171, %172 : vector<8x1xi32>
    %174 = vector.broadcast %173 : vector<8x1xi32> to vector<8x128xi32>
    %175 = vector.broadcast %1 : vector<1x128xi32> to vector<8x128xi32>
    %176 = arith.cmpi eq, %174, %175 : vector<8x128xi32>
    %177 = arith.ori %167, %176 : vector<8x128xi1>
    %c21_i32_28 = arith.constant 21 : i32
    %178 = vector.broadcast %c21_i32_28 : i32 to vector<8x1xi32>
    %179 = arith.shrsi %107, %178 : vector<8x1xi32>
    %c7_i32_29 = arith.constant 7 : i32
    %180 = vector.broadcast %c7_i32_29 : i32 to vector<8x1xi32>
    %181 = arith.andi %179, %180 : vector<8x1xi32>
    %c57_i32 = arith.constant 57 : i32
    %182 = vector.broadcast %c57_i32 : i32 to vector<8x1xi32>
    %183 = arith.addi %181, %182 : vector<8x1xi32>
    %184 = vector.broadcast %183 : vector<8x1xi32> to vector<8x128xi32>
    %185 = vector.broadcast %1 : vector<1x128xi32> to vector<8x128xi32>
    %186 = arith.cmpi eq, %184, %185 : vector<8x128xi32>
    %187 = arith.ori %177, %186 : vector<8x128xi1>
    %c24_i32_30 = arith.constant 24 : i32
    %188 = vector.broadcast %c24_i32_30 : i32 to vector<8x1xi32>
    %189 = arith.shrsi %107, %188 : vector<8x1xi32>
    %c7_i32_31 = arith.constant 7 : i32
    %190 = vector.broadcast %c7_i32_31 : i32 to vector<8x1xi32>
    %191 = arith.andi %189, %190 : vector<8x1xi32>
    %c60_i32 = arith.constant 60 : i32
    %192 = vector.broadcast %c60_i32 : i32 to vector<8x1xi32>
    %193 = arith.addi %191, %192 : vector<8x1xi32>
    %194 = vector.broadcast %193 : vector<8x1xi32> to vector<8x128xi32>
    %195 = vector.broadcast %1 : vector<1x128xi32> to vector<8x128xi32>
    %196 = arith.cmpi eq, %194, %195 : vector<8x128xi32>
    %197 = arith.ori %187, %196 : vector<8x128xi1>
    %c27_i32_32 = arith.constant 27 : i32
    %198 = vector.broadcast %c27_i32_32 : i32 to vector<8x1xi32>
    %199 = arith.shrsi %107, %198 : vector<8x1xi32>
    %c1_i32_33 = arith.constant 1 : i32
    %200 = vector.broadcast %c1_i32_33 : i32 to vector<8x1xi32>
    %201 = arith.andi %199, %200 : vector<8x1xi32>
    %c1_i32_34 = arith.constant 1 : i32
    %202 = vector.broadcast %c1_i32_34 : i32 to vector<8x1xi32>
    %203 = arith.cmpi eq, %201, %202 : vector<8x1xi32>
    %c160_i32 = arith.constant 160 : i32
    %204 = vector.broadcast %c160_i32 : i32 to vector<1x384xi32>
    %205 = arith.cmpi sge, %2, %204 : vector<1x384xi32>
    %c192_i32 = arith.constant 192 : i32
    %206 = vector.broadcast %c192_i32 : i32 to vector<1x384xi32>
    %207 = arith.cmpi slt, %2, %206 : vector<1x384xi32>
    %208 = arith.andi %205, %207 : vector<1x384xi1>
    %209 = vector.broadcast %203 : vector<8x1xi1> to vector<8x384xi1>
    %210 = vector.broadcast %208 : vector<1x384xi1> to vector<8x384xi1>
    %211 = arith.andi %209, %210 : vector<8x384xi1>
    %212 = arith.ori %106, %211 : vector<8x384xi1>
    %213 = vector.extract_strided_slice %0 {offsets = [0, 2], sizes = [8, 1], strides = [1, 1]} : vector<8x4xi32> to vector<8x1xi32>
    %c0_i32_35 = arith.constant 0 : i32
    %214 = vector.broadcast %c0_i32_35 : i32 to vector<8x1xi32>
    %215 = arith.shrsi %213, %214 : vector<8x1xi32>
    %c7_i32_36 = arith.constant 7 : i32
    %216 = vector.broadcast %c7_i32_36 : i32 to vector<8x1xi32>
    %217 = arith.andi %215, %216 : vector<8x1xi32>
    %c64_i32_37 = arith.constant 64 : i32
    %218 = vector.broadcast %c64_i32_37 : i32 to vector<8x1xi32>
    %219 = arith.addi %217, %218 : vector<8x1xi32>
    %220 = vector.broadcast %219 : vector<8x1xi32> to vector<8x128xi32>
    %221 = vector.broadcast %1 : vector<1x128xi32> to vector<8x128xi32>
    %222 = arith.cmpi eq, %220, %221 : vector<8x128xi32>
    %223 = arith.ori %197, %222 : vector<8x128xi1>
    %c3_i32_38 = arith.constant 3 : i32
    %224 = vector.broadcast %c3_i32_38 : i32 to vector<8x1xi32>
    %225 = arith.shrsi %213, %224 : vector<8x1xi32>
    %c7_i32_39 = arith.constant 7 : i32
    %226 = vector.broadcast %c7_i32_39 : i32 to vector<8x1xi32>
    %227 = arith.andi %225, %226 : vector<8x1xi32>
    %c67_i32 = arith.constant 67 : i32
    %228 = vector.broadcast %c67_i32 : i32 to vector<8x1xi32>
    %229 = arith.addi %227, %228 : vector<8x1xi32>
    %230 = vector.broadcast %229 : vector<8x1xi32> to vector<8x128xi32>
    %231 = vector.broadcast %1 : vector<1x128xi32> to vector<8x128xi32>
    %232 = arith.cmpi eq, %230, %231 : vector<8x128xi32>
    %233 = arith.ori %223, %232 : vector<8x128xi1>
    %c6_i32_40 = arith.constant 6 : i32
    %234 = vector.broadcast %c6_i32_40 : i32 to vector<8x1xi32>
    %235 = arith.shrsi %213, %234 : vector<8x1xi32>
    %c7_i32_41 = arith.constant 7 : i32
    %236 = vector.broadcast %c7_i32_41 : i32 to vector<8x1xi32>
    %237 = arith.andi %235, %236 : vector<8x1xi32>
    %c70_i32 = arith.constant 70 : i32
    %238 = vector.broadcast %c70_i32 : i32 to vector<8x1xi32>
    %239 = arith.addi %237, %238 : vector<8x1xi32>
    %240 = vector.broadcast %239 : vector<8x1xi32> to vector<8x128xi32>
    %241 = vector.broadcast %1 : vector<1x128xi32> to vector<8x128xi32>
    %242 = arith.cmpi eq, %240, %241 : vector<8x128xi32>
    %243 = arith.ori %233, %242 : vector<8x128xi1>
    %c9_i32_42 = arith.constant 9 : i32
    %244 = vector.broadcast %c9_i32_42 : i32 to vector<8x1xi32>
    %245 = arith.shrsi %213, %244 : vector<8x1xi32>
    %c7_i32_43 = arith.constant 7 : i32
    %246 = vector.broadcast %c7_i32_43 : i32 to vector<8x1xi32>
    %247 = arith.andi %245, %246 : vector<8x1xi32>
    %c73_i32 = arith.constant 73 : i32
    %248 = vector.broadcast %c73_i32 : i32 to vector<8x1xi32>
    %249 = arith.addi %247, %248 : vector<8x1xi32>
    %250 = vector.broadcast %249 : vector<8x1xi32> to vector<8x128xi32>
    %251 = vector.broadcast %1 : vector<1x128xi32> to vector<8x128xi32>
    %252 = arith.cmpi eq, %250, %251 : vector<8x128xi32>
    %253 = arith.ori %243, %252 : vector<8x128xi1>
    %c12_i32_44 = arith.constant 12 : i32
    %254 = vector.broadcast %c12_i32_44 : i32 to vector<8x1xi32>
    %255 = arith.shrsi %213, %254 : vector<8x1xi32>
    %c7_i32_45 = arith.constant 7 : i32
    %256 = vector.broadcast %c7_i32_45 : i32 to vector<8x1xi32>
    %257 = arith.andi %255, %256 : vector<8x1xi32>
    %c77_i32 = arith.constant 77 : i32
    %258 = vector.broadcast %c77_i32 : i32 to vector<8x1xi32>
    %259 = arith.addi %257, %258 : vector<8x1xi32>
    %260 = vector.broadcast %259 : vector<8x1xi32> to vector<8x128xi32>
    %261 = vector.broadcast %1 : vector<1x128xi32> to vector<8x128xi32>
    %262 = arith.cmpi eq, %260, %261 : vector<8x128xi32>
    %263 = arith.ori %253, %262 : vector<8x128xi1>
    %c15_i32_46 = arith.constant 15 : i32
    %264 = vector.broadcast %c15_i32_46 : i32 to vector<8x1xi32>
    %265 = arith.shrsi %213, %264 : vector<8x1xi32>
    %c7_i32_47 = arith.constant 7 : i32
    %266 = vector.broadcast %c7_i32_47 : i32 to vector<8x1xi32>
    %267 = arith.andi %265, %266 : vector<8x1xi32>
    %c83_i32 = arith.constant 83 : i32
    %268 = vector.broadcast %c83_i32 : i32 to vector<8x1xi32>
    %269 = arith.addi %267, %268 : vector<8x1xi32>
    %270 = vector.broadcast %269 : vector<8x1xi32> to vector<8x128xi32>
    %271 = vector.broadcast %1 : vector<1x128xi32> to vector<8x128xi32>
    %272 = arith.cmpi eq, %270, %271 : vector<8x128xi32>
    %273 = arith.ori %263, %272 : vector<8x128xi1>
    %c18_i32_48 = arith.constant 18 : i32
    %274 = vector.broadcast %c18_i32_48 : i32 to vector<8x1xi32>
    %275 = arith.shrsi %213, %274 : vector<8x1xi32>
    %c7_i32_49 = arith.constant 7 : i32
    %276 = vector.broadcast %c7_i32_49 : i32 to vector<8x1xi32>
    %277 = arith.andi %275, %276 : vector<8x1xi32>
    %c86_i32 = arith.constant 86 : i32
    %278 = vector.broadcast %c86_i32 : i32 to vector<8x1xi32>
    %279 = arith.addi %277, %278 : vector<8x1xi32>
    %280 = vector.broadcast %279 : vector<8x1xi32> to vector<8x128xi32>
    %281 = vector.broadcast %1 : vector<1x128xi32> to vector<8x128xi32>
    %282 = arith.cmpi eq, %280, %281 : vector<8x128xi32>
    %283 = arith.ori %273, %282 : vector<8x128xi1>
    %c21_i32_50 = arith.constant 21 : i32
    %284 = vector.broadcast %c21_i32_50 : i32 to vector<8x1xi32>
    %285 = arith.shrsi %213, %284 : vector<8x1xi32>
    %c7_i32_51 = arith.constant 7 : i32
    %286 = vector.broadcast %c7_i32_51 : i32 to vector<8x1xi32>
    %287 = arith.andi %285, %286 : vector<8x1xi32>
    %c89_i32 = arith.constant 89 : i32
    %288 = vector.broadcast %c89_i32 : i32 to vector<8x1xi32>
    %289 = arith.addi %287, %288 : vector<8x1xi32>
    %290 = vector.broadcast %289 : vector<8x1xi32> to vector<8x128xi32>
    %291 = vector.broadcast %1 : vector<1x128xi32> to vector<8x128xi32>
    %292 = arith.cmpi eq, %290, %291 : vector<8x128xi32>
    %293 = arith.ori %283, %292 : vector<8x128xi1>
    %c24_i32_52 = arith.constant 24 : i32
    %294 = vector.broadcast %c24_i32_52 : i32 to vector<8x1xi32>
    %295 = arith.shrsi %213, %294 : vector<8x1xi32>
    %c7_i32_53 = arith.constant 7 : i32
    %296 = vector.broadcast %c7_i32_53 : i32 to vector<8x1xi32>
    %297 = arith.andi %295, %296 : vector<8x1xi32>
    %c92_i32 = arith.constant 92 : i32
    %298 = vector.broadcast %c92_i32 : i32 to vector<8x1xi32>
    %299 = arith.addi %297, %298 : vector<8x1xi32>
    %300 = vector.broadcast %299 : vector<8x1xi32> to vector<8x128xi32>
    %301 = vector.broadcast %1 : vector<1x128xi32> to vector<8x128xi32>
    %302 = arith.cmpi eq, %300, %301 : vector<8x128xi32>
    %303 = arith.ori %293, %302 : vector<8x128xi1>
    %c27_i32_54 = arith.constant 27 : i32
    %304 = vector.broadcast %c27_i32_54 : i32 to vector<8x1xi32>
    %305 = arith.shrsi %213, %304 : vector<8x1xi32>
    %c1_i32_55 = arith.constant 1 : i32
    %306 = vector.broadcast %c1_i32_55 : i32 to vector<8x1xi32>
    %307 = arith.andi %305, %306 : vector<8x1xi32>
    %c1_i32_56 = arith.constant 1 : i32
    %308 = vector.broadcast %c1_i32_56 : i32 to vector<8x1xi32>
    %309 = arith.cmpi eq, %307, %308 : vector<8x1xi32>
    %c256_i32 = arith.constant 256 : i32
    %310 = vector.broadcast %c256_i32 : i32 to vector<1x384xi32>
    %311 = arith.cmpi sge, %2, %310 : vector<1x384xi32>
    %c288_i32 = arith.constant 288 : i32
    %312 = vector.broadcast %c288_i32 : i32 to vector<1x384xi32>
    %313 = arith.cmpi slt, %2, %312 : vector<1x384xi32>
    %314 = arith.andi %311, %313 : vector<1x384xi1>
    %315 = vector.broadcast %309 : vector<8x1xi1> to vector<8x384xi1>
    %316 = vector.broadcast %314 : vector<1x384xi1> to vector<8x384xi1>
    %317 = arith.andi %315, %316 : vector<8x384xi1>
    %318 = arith.ori %212, %317 : vector<8x384xi1>
    %319 = vector.extract_strided_slice %0 {offsets = [0, 3], sizes = [8, 1], strides = [1, 1]} : vector<8x4xi32> to vector<8x1xi32>
    %c0_i32_57 = arith.constant 0 : i32
    %320 = vector.broadcast %c0_i32_57 : i32 to vector<8x1xi32>
    %321 = arith.shrsi %319, %320 : vector<8x1xi32>
    %c7_i32_58 = arith.constant 7 : i32
    %322 = vector.broadcast %c7_i32_58 : i32 to vector<8x1xi32>
    %323 = arith.andi %321, %322 : vector<8x1xi32>
    %c96_i32_59 = arith.constant 96 : i32
    %324 = vector.broadcast %c96_i32_59 : i32 to vector<8x1xi32>
    %325 = arith.addi %323, %324 : vector<8x1xi32>
    %326 = vector.broadcast %325 : vector<8x1xi32> to vector<8x128xi32>
    %327 = vector.broadcast %1 : vector<1x128xi32> to vector<8x128xi32>
    %328 = arith.cmpi eq, %326, %327 : vector<8x128xi32>
    %329 = arith.ori %303, %328 : vector<8x128xi1>
    %c3_i32_60 = arith.constant 3 : i32
    %330 = vector.broadcast %c3_i32_60 : i32 to vector<8x1xi32>
    %331 = arith.shrsi %319, %330 : vector<8x1xi32>
    %c7_i32_61 = arith.constant 7 : i32
    %332 = vector.broadcast %c7_i32_61 : i32 to vector<8x1xi32>
    %333 = arith.andi %331, %332 : vector<8x1xi32>
    %c99_i32 = arith.constant 99 : i32
    %334 = vector.broadcast %c99_i32 : i32 to vector<8x1xi32>
    %335 = arith.addi %333, %334 : vector<8x1xi32>
    %336 = vector.broadcast %335 : vector<8x1xi32> to vector<8x128xi32>
    %337 = vector.broadcast %1 : vector<1x128xi32> to vector<8x128xi32>
    %338 = arith.cmpi eq, %336, %337 : vector<8x128xi32>
    %339 = arith.ori %329, %338 : vector<8x128xi1>
    %c6_i32_62 = arith.constant 6 : i32
    %340 = vector.broadcast %c6_i32_62 : i32 to vector<8x1xi32>
    %341 = arith.shrsi %319, %340 : vector<8x1xi32>
    %c7_i32_63 = arith.constant 7 : i32
    %342 = vector.broadcast %c7_i32_63 : i32 to vector<8x1xi32>
    %343 = arith.andi %341, %342 : vector<8x1xi32>
    %c102_i32 = arith.constant 102 : i32
    %344 = vector.broadcast %c102_i32 : i32 to vector<8x1xi32>
    %345 = arith.addi %343, %344 : vector<8x1xi32>
    %346 = vector.broadcast %345 : vector<8x1xi32> to vector<8x128xi32>
    %347 = vector.broadcast %1 : vector<1x128xi32> to vector<8x128xi32>
    %348 = arith.cmpi eq, %346, %347 : vector<8x128xi32>
    %349 = arith.ori %339, %348 : vector<8x128xi1>
    %c9_i32_64 = arith.constant 9 : i32
    %350 = vector.broadcast %c9_i32_64 : i32 to vector<8x1xi32>
    %351 = arith.shrsi %319, %350 : vector<8x1xi32>
    %c7_i32_65 = arith.constant 7 : i32
    %352 = vector.broadcast %c7_i32_65 : i32 to vector<8x1xi32>
    %353 = arith.andi %351, %352 : vector<8x1xi32>
    %c105_i32 = arith.constant 105 : i32
    %354 = vector.broadcast %c105_i32 : i32 to vector<8x1xi32>
    %355 = arith.addi %353, %354 : vector<8x1xi32>
    %356 = vector.broadcast %355 : vector<8x1xi32> to vector<8x128xi32>
    %357 = vector.broadcast %1 : vector<1x128xi32> to vector<8x128xi32>
    %358 = arith.cmpi eq, %356, %357 : vector<8x128xi32>
    %359 = arith.ori %349, %358 : vector<8x128xi1>
    %c12_i32_66 = arith.constant 12 : i32
    %360 = vector.broadcast %c12_i32_66 : i32 to vector<8x1xi32>
    %361 = arith.shrsi %319, %360 : vector<8x1xi32>
    %c7_i32_67 = arith.constant 7 : i32
    %362 = vector.broadcast %c7_i32_67 : i32 to vector<8x1xi32>
    %363 = arith.andi %361, %362 : vector<8x1xi32>
    %c109_i32 = arith.constant 109 : i32
    %364 = vector.broadcast %c109_i32 : i32 to vector<8x1xi32>
    %365 = arith.addi %363, %364 : vector<8x1xi32>
    %366 = vector.broadcast %365 : vector<8x1xi32> to vector<8x128xi32>
    %367 = vector.broadcast %1 : vector<1x128xi32> to vector<8x128xi32>
    %368 = arith.cmpi eq, %366, %367 : vector<8x128xi32>
    %369 = arith.ori %359, %368 : vector<8x128xi1>
    %c15_i32_68 = arith.constant 15 : i32
    %370 = vector.broadcast %c15_i32_68 : i32 to vector<8x1xi32>
    %371 = arith.shrsi %319, %370 : vector<8x1xi32>
    %c7_i32_69 = arith.constant 7 : i32
    %372 = vector.broadcast %c7_i32_69 : i32 to vector<8x1xi32>
    %373 = arith.andi %371, %372 : vector<8x1xi32>
    %c115_i32 = arith.constant 115 : i32
    %374 = vector.broadcast %c115_i32 : i32 to vector<8x1xi32>
    %375 = arith.addi %373, %374 : vector<8x1xi32>
    %376 = vector.broadcast %375 : vector<8x1xi32> to vector<8x128xi32>
    %377 = vector.broadcast %1 : vector<1x128xi32> to vector<8x128xi32>
    %378 = arith.cmpi eq, %376, %377 : vector<8x128xi32>
    %379 = arith.ori %369, %378 : vector<8x128xi1>
    %c18_i32_70 = arith.constant 18 : i32
    %380 = vector.broadcast %c18_i32_70 : i32 to vector<8x1xi32>
    %381 = arith.shrsi %319, %380 : vector<8x1xi32>
    %c7_i32_71 = arith.constant 7 : i32
    %382 = vector.broadcast %c7_i32_71 : i32 to vector<8x1xi32>
    %383 = arith.andi %381, %382 : vector<8x1xi32>
    %c118_i32 = arith.constant 118 : i32
    %384 = vector.broadcast %c118_i32 : i32 to vector<8x1xi32>
    %385 = arith.addi %383, %384 : vector<8x1xi32>
    %386 = vector.broadcast %385 : vector<8x1xi32> to vector<8x128xi32>
    %387 = vector.broadcast %1 : vector<1x128xi32> to vector<8x128xi32>
    %388 = arith.cmpi eq, %386, %387 : vector<8x128xi32>
    %389 = arith.ori %379, %388 : vector<8x128xi1>
    %c21_i32_72 = arith.constant 21 : i32
    %390 = vector.broadcast %c21_i32_72 : i32 to vector<8x1xi32>
    %391 = arith.shrsi %319, %390 : vector<8x1xi32>
    %c7_i32_73 = arith.constant 7 : i32
    %392 = vector.broadcast %c7_i32_73 : i32 to vector<8x1xi32>
    %393 = arith.andi %391, %392 : vector<8x1xi32>
    %c121_i32 = arith.constant 121 : i32
    %394 = vector.broadcast %c121_i32 : i32 to vector<8x1xi32>
    %395 = arith.addi %393, %394 : vector<8x1xi32>
    %396 = vector.broadcast %395 : vector<8x1xi32> to vector<8x128xi32>
    %397 = vector.broadcast %1 : vector<1x128xi32> to vector<8x128xi32>
    %398 = arith.cmpi eq, %396, %397 : vector<8x128xi32>
    %399 = arith.ori %389, %398 : vector<8x128xi1>
    %c24_i32_74 = arith.constant 24 : i32
    %400 = vector.broadcast %c24_i32_74 : i32 to vector<8x1xi32>
    %401 = arith.shrsi %319, %400 : vector<8x1xi32>
    %c7_i32_75 = arith.constant 7 : i32
    %402 = vector.broadcast %c7_i32_75 : i32 to vector<8x1xi32>
    %403 = arith.andi %401, %402 : vector<8x1xi32>
    %c124_i32 = arith.constant 124 : i32
    %404 = vector.broadcast %c124_i32 : i32 to vector<8x1xi32>
    %405 = arith.addi %403, %404 : vector<8x1xi32>
    %406 = vector.broadcast %405 : vector<8x1xi32> to vector<8x128xi32>
    %407 = vector.broadcast %1 : vector<1x128xi32> to vector<8x128xi32>
    %408 = arith.cmpi eq, %406, %407 : vector<8x128xi32>
    %409 = arith.ori %399, %408 : vector<8x128xi1>
    %c27_i32_76 = arith.constant 27 : i32
    %410 = vector.broadcast %c27_i32_76 : i32 to vector<8x1xi32>
    %411 = arith.shrsi %319, %410 : vector<8x1xi32>
    %c1_i32_77 = arith.constant 1 : i32
    %412 = vector.broadcast %c1_i32_77 : i32 to vector<8x1xi32>
    %413 = arith.andi %411, %412 : vector<8x1xi32>
    %c1_i32_78 = arith.constant 1 : i32
    %414 = vector.broadcast %c1_i32_78 : i32 to vector<8x1xi32>
    %415 = arith.cmpi eq, %413, %414 : vector<8x1xi32>
    %c352_i32 = arith.constant 352 : i32
    %416 = vector.broadcast %c352_i32 : i32 to vector<1x384xi32>
    %417 = arith.cmpi sge, %2, %416 : vector<1x384xi32>
    %c384_i32 = arith.constant 384 : i32
    %418 = vector.broadcast %c384_i32 : i32 to vector<1x384xi32>
    %419 = arith.cmpi slt, %2, %418 : vector<1x384xi32>
    %420 = arith.andi %417, %419 : vector<1x384xi1>
    %421 = vector.broadcast %415 : vector<8x1xi1> to vector<8x384xi1>
    %422 = vector.broadcast %420 : vector<1x384xi1> to vector<8x384xi1>
    %423 = arith.andi %421, %422 : vector<8x384xi1>
    %424 = arith.ori %318, %423 : vector<8x384xi1>
    %425 = arith.extui %409 : vector<8x128xi1> to vector<8x128xi32>
    %426 = arith.sitofp %425 : vector<8x128xi32> to vector<8x128xf32>
    %c0_79 = arith.constant 0 : index
    %c0_80 = arith.constant 0 : index
    %427 = vector.load %arg2[%c0_79, %c0_80] : memref<128x384xf32, #tpu.memory_space<vmem>>, vector<128x384xf32>
    %cst = arith.constant dense<0.000000e+00> : vector<8x384xf32>
    %428 = tpu.matmul %426, %427, %cst {dimension_numbers = #tpu.dot_dimension_numbers<[1], [0], [0], [1], [0, 0, 1, 1], [], []>} : vector<8x128xf32>, vector<128x384xf32>, vector<8x384xf32> -> vector<8x384xf32>
    %c0_81 = arith.constant 0 : index
    %c0_82 = arith.constant 0 : index
    %429 = vector.load %arg3[%c0_81, %c0_82] : memref<2x384xf32, #tpu.memory_space<vmem>>, vector<1x384xf32>
    %430 = vector.broadcast %429 : vector<1x384xf32> to vector<8x384xf32>
    %431 = arith.addf %428, %430 : vector<8x384xf32>
    %c1 = arith.constant 1 : index
    %c0_83 = arith.constant 0 : index
    %432 = vector.load %arg3[%c1, %c0_83] : memref<2x384xf32, #tpu.memory_space<vmem>>, vector<1x384xf32>
    %433 = vector.shape_cast %432 : vector<1x384xf32> to vector<1x384xf32>
    %434 = vector.broadcast %433 : vector<1x384xf32> to vector<8x384xf32>
    %435 = arith.select %424, %434, %431 : vector<8x384xi1>, vector<8x384xf32>
    %c0_84 = arith.constant 0 : index
    %c0_85 = arith.constant 0 : index
    %436 = vector.load %arg4[%c0_84, %c0_85] : memref<8x384xf32, #tpu.memory_space<vmem>>, vector<8x384xf32>
    tpu.vector_store %arg4[%c0_84, %c0_85], %435 {strides = array<i32>} : memref<8x384xf32, #tpu.memory_space<vmem>>, vector<8x384xf32>,
    return
  }
  func.func @transform_0(%arg0: i32) -> (i32, i32) {
    %c0_i32 = arith.constant 0 : i32
    %c0_i32_0 = arith.constant 0 : i32
    return %arg0, %c0_i32 : i32, i32
  }
  func.func @transform_1(%arg0: i32) -> (i32, i32) {
    %c0_i32 = arith.constant 0 : i32
    %c0_i32_0 = arith.constant 0 : i32
    %c0_i32_1 = arith.constant 0 : i32
    return %c0_i32, %c0_i32_0 : i32, i32
  }
  func.func @transform_2(%arg0: i32) -> (i32, i32) {
    %c0_i32 = arith.constant 0 : i32
    %c0_i32_0 = arith.constant 0 : i32
    %c0_i32_1 = arith.constant 0 : i32
    return %c0_i32, %c0_i32_0 : i32, i32
  }
  func.func @transform_3(%arg0: i32) -> (i32, i32) {
    %c0_i32 = arith.constant 0 : i32
    %c0_i32_0 = arith.constant 0 : i32
    return %arg0, %c0_i32 : i32, i32
  }
}

</mosaic_0001>

<llo_original>
// kernel: tile.17
$region0: #{tile.17}
  #allocation0 [shape = 's32[1]{0}', space=sflag, size = 0x4, scoped, tag = 'scoped memory for tile.17']
  %s0 = inlined_call_operand.vmem [shape: f32[96], index: 0, kind: input, shape index: {}]
  %s1 = inlined_call_operand.vmem [shape: f32[4,96], index: 1, kind: output, shape index: {}]
  // Predicated region
  $region2: #{tile.17} parent=0 // pred_check
    _
  $region3: #{tile.17} parent=0 // pred_check_branch
    %3 = sbr.rel (0) target = $region5
  $region4: #{tile.17} parent=0 // pred_region
    _
  $region5: #{tile.17} parent=0 // pred_fallthru
    _
  %v4 = vld [vmem:[%s0] ss:$0 sm:$0xff]
  %5 = vst [vmem:[%s1] sm:$0xf] %v4

// kernel: tile.19
$region0: #{tile.19}
  %s0 = inlined_call_operand.vmem [shape: f32[4,96], index: 0, kind: input, shape index: {}]
  %s1 = inlined_call_operand.vmem [shape: f32[1,384], index: 1, kind: output, shape index: {}]
  $region1: #{tile.19} parent=0
    #allocation0 [shape = 'u8[12288]{0}', space=vmem, size = 0x3000, scoped, tag = 'scoped mem for output reshape']
    #allocation1 [shape = 'u8[4096]{0}', space=vmem, size = 0x1000, scoped, tag = 'scoped mem for input reshape']
    %s3 = sshllo.u32 0, 4
    %v4 = vld [vmem:[%s0] sm:%s3]
    %5 = vst [vmem:[#allocation1] sm:%s3] %v4
    %v6 = vld [vmem:[#allocation1] sm:$0x1]
    %vm7 = vcmask 785408
    %8 = vst.msk [vmem:[#allocation0] sm:$0x1] %vm7, %v6
    %s9 = scalar_lea.vmem [#allocation1], 1
    %v10 = vld [vmem:[%s9] sm:$0x1]
    %s11 = scalar_lea.vmem [#allocation1], 1
    %v12 = vld [vmem:[%s11] sm:$0x1]
    %vm13 = vcmask 261120
    %v14 = vsel %vm13, %v12, %v10
    %15 = vrot.lane.b32.xlu0 %v14, 96
    %v16 = vpop.permute.xlu0 %15
    %vm17 = vcmask 523264
    %s18 = scalar_lea.vmem [#allocation0], 8
    %19 = vst.msk [vmem:[%s18] sm:$0x1] %vm17, %v16
    %vm20 = vcmask 1048320
    %21 = vst.msk [vmem:[#allocation0] sm:$0x1] %vm20, %v16
    %s22 = scalar_lea.vmem [#allocation1], 2
    %v23 = vld [vmem:[%s22] sm:$0x1]
    %s24 = scalar_lea.vmem [#allocation1], 2
    %v25 = vld [vmem:[%s24] sm:$0x1]
    %vm26 = vcmask 523264
    %v27 = vsel %vm26, %v25, %v23
    %28 = vrot.lane.b32.xlu0 %v27, 64
    %v29 = vpop.permute.xlu0 %28
    %vm30 = vcmask 261120
    %s31 = scalar_lea.vmem [#allocation0], 16
    %32 = vst.msk [vmem:[%s31] sm:$0x1] %vm30, %v29
    %vm33 = vcmask 1048064
    %s34 = scalar_lea.vmem [#allocation0], 8
    %35 = vst.msk [vmem:[%s34] sm:$0x1] %vm33, %v29
    %s36 = scalar_lea.vmem [#allocation1], 3
    %v37 = vld [vmem:[%s36] sm:$0x1]
    %38 = vrot.lane.b32.xlu0 %v37, 32
    %v39 = vpop.permute.xlu0 %38
    %vm40 = vcmask 1047808
    %s41 = scalar_lea.vmem [#allocation0], 16
    %42 = vst.msk [vmem:[%s41] sm:$0x1] %vm40, %v39
    %s44 = sshllo.u32 0, 1
    %v46 = vld [vmem:[#allocation0] sm:%s44]
    %s47 = sshllo.u32 0, 1
    %48 = vst [vmem:[%s1] sm:%s47] %v46
    %s49 = scalar_lea.vmem [#allocation0], 8
    %v50 = vld [vmem:[%s49] sm:%s44]
    %s51 = sshllo.u32 0, 1
    %s52 = scalar_lea.vmem %s1, 1
    %53 = vst [vmem:[%s52] sm:%s51] %v50
    %s54 = scalar_lea.vmem [#allocation0], 16
    %v55 = vld [vmem:[%s54] sm:%s44]
    %s56 = sshllo.u32 0, 1
    %s57 = smul.addr 1, 2
    %s58 = scalar_lea.vmem %s1, %s57
    %59 = vst [vmem:[%s58] sm:%s56] %v55

// kernel: alchemy_embedding.1
$region0: #{alchemy_embedding.1}
  #allocation0 [shape = 'u32[]', space=smem, size = 0x4, offset = 0x4, fixed_abs, tag = 'smem constant byte address 0x4 - core index']
  #allocation1 [shape = 'u32[144,128]{1,0:T(1,128)}', space=vmem, size = 0x12000, scoped, tag = 'internal scratch']
  %s0 = inlined_call_operand.vmem [shape: s32[8,4], index: 0, kind: input, shape index: {}]
  %s1 = inlined_call_operand.vmem [shape: f32[128,384], index: 1, kind: input, shape index: {}]
  %s2 = inlined_call_operand.vmem [shape: f32[2,384], index: 2, kind: input, shape index: {}]
  %s3 = inlined_call_operand.vmem [shape: f32[8,384], index: 3, kind: output, shape index: {}]
  %s4 = sld [smem:[#allocation0]]
  $region22: #{alchemy_embedding.1} parent=0
    _
  %s6 = ssub.s32 1, %s4
  %s7 = scalar_select 0, %s6, %s4
  // Predicated region
  $region2: #{alchemy_embedding.1} parent=0 // pred_check
    _
  $region3: #{alchemy_embedding.1} parent=0 // pred_check_branch
    %9 = sbr.rel (0) target = $region5
  $region4: #{alchemy_embedding.1} parent=0 // pred_region
    _
  $region5: #{alchemy_embedding.1} parent=0 // pred_fallthru
    _
  // Predicated region
  $region6: #{alchemy_embedding.1} parent=0 // pred_check
    _
  $region7: #{alchemy_embedding.1} parent=0 // pred_check_branch
    %11 = sbr.rel (0) target = $region9
  $region8: #{alchemy_embedding.1} parent=0 // pred_region
    _
  $region9: #{alchemy_embedding.1} parent=0 // pred_fallthru
    _
  // Predicated region
  $region10: #{alchemy_embedding.1} parent=0 // pred_check
    _
  $region11: #{alchemy_embedding.1} parent=0 // pred_check_branch
    %13 = sbr.rel (0) target = $region13
  $region12: #{alchemy_embedding.1} parent=0 // pred_region
    _
  $region13: #{alchemy_embedding.1} parent=0 // pred_fallthru
    _
  %v14 = vld [vmem:[%s0] sm:$0xff]
  %v15 = vlaneseq
  %v16 = vand.u32 %v15, 127
  %v17 = vadd.s32 %v16, 128
  %v18 = vadd.s32 %v16, 256
  %v19 = vand.u32 %v14, 7
  %20 = vset.pattern.permute.xlu0 0
  %21 = vperm.xlu0 %20, %v19
  %v22 = vpop.permute.xlu0 %21
  %vm23 = vcmp.eq.s32.totalorder %v22, %v16
  %v24 = vshra.s32 %v14, 3
  %v25 = vand.u32 %v24, 7
  %v26 = vadd.s32 %v25, 3
  %27 = vset.pattern.permute.xlu0 0
  %28 = vperm.xlu0 %27, %v26
  %v29 = vpop.permute.xlu0 %28
  %vm30 = vcmp.eq.s32.totalorder %v29, %v16
  %vm31 = vmor %vm23, %vm30
  %v32 = vshra.s32 %v14, 6
  %v33 = vand.u32 %v32, 7
  %v34 = vadd.s32 %v33, 6
  %35 = vset.pattern.permute.xlu0 0
  %36 = vperm.xlu0 %35, %v34
  %v37 = vpop.permute.xlu0 %36
  %vm38 = vcmp.eq.s32.totalorder %v37, %v16
  %vm39 = vmor %vm31, %vm38
  %v40 = vshra.s32 %v14, 9
  %v41 = vand.u32 %v40, 7
  %v42 = vadd.s32 %v41, 9
  %43 = vset.pattern.permute.xlu0 0
  %44 = vperm.xlu0 %43, %v42
  %v45 = vpop.permute.xlu0 %44
  %vm46 = vcmp.eq.s32.totalorder %v45, %v16
  %vm47 = vmor %vm39, %vm46
  %v48 = vshra.s32 %v14, 12
  %v49 = vand.u32 %v48, 7
  %v50 = vadd.s32 %v49, 13
  %51 = vset.pattern.permute.xlu0 0
  %52 = vperm.xlu0 %51, %v50
  %v53 = vpop.permute.xlu0 %52
  %vm54 = vcmp.eq.s32.totalorder %v53, %v16
  %vm55 = vmor %vm47, %vm54
  %v56 = vshra.s32 %v14, 15
  %v57 = vand.u32 %v56, 7
  %v58 = vadd.s32 %v57, 19
  %59 = vset.pattern.permute.xlu0 0
  %60 = vperm.xlu0 %59, %v58
  %v61 = vpop.permute.xlu0 %60
  %vm62 = vcmp.eq.s32.totalorder %v61, %v16
  %vm63 = vmor %vm55, %vm62
  %v64 = vshra.s32 %v14, 18
  %v65 = vand.u32 %v64, 7
  %v66 = vadd.s32 %v65, 22
  %67 = vset.pattern.permute.xlu0 0
  %68 = vperm.xlu0 %67, %v66
  %v69 = vpop.permute.xlu0 %68
  %vm70 = vcmp.eq.s32.totalorder %v69, %v16
  %vm71 = vmor %vm63, %vm70
  %v72 = vshra.s32 %v14, 21
  %v73 = vand.u32 %v72, 7
  %v74 = vadd.s32 %v73, 25
  %75 = vset.pattern.permute.xlu0 0
  %76 = vperm.xlu0 %75, %v74
  %v77 = vpop.permute.xlu0 %76
  %vm78 = vcmp.eq.s32.totalorder %v77, %v16
  %vm79 = vmor %vm71, %vm78
  %v80 = vshra.s32 %v14, 24
  %v81 = vand.u32 %v80, 7
  %v82 = vadd.s32 %v81, 28
  %83 = vset.pattern.permute.xlu0 0
  %84 = vperm.xlu0 %83, %v82
  %v85 = vpop.permute.xlu0 %84
  %vm86 = vcmp.eq.s32.totalorder %v85, %v16
  %vm87 = vmor %vm79, %vm86
  %v88 = vshra.s32 %v14, 27
  %v89 = vand.u32 %v88, 1
  %vm90 = vcmp.eq.s32.totalorder %v89, 1
  %vm91 = vcmp.ge.s32.totalorder %v16, 64
  %vm92 = vcmp.ge.s32.totalorder %v17, 64
  %vm93 = vcmp.ge.s32.totalorder %v18, 64
  %vm94 = vcmp.lt.s32.totalorder %v16, 96
  %vm95 = vcmp.lt.s32.totalorder %v17, 96
  %vm96 = vcmp.lt.s32.totalorder %v18, 96
  %vm97 = vmand %vm91, %vm94
  %vm98 = vmand %vm92, %vm95
  %vm99 = vmand %vm93, %vm96
  %v100 = vsel %vm90, 1, 0
  %101 = vset.pattern.permute.xlu0 0
  %102 = vperm.xlu0 %101, %v100
  %v103 = vpop.permute.xlu0 %102
  %vm104 = vcmp.eq.s32.totalorder %v103, 1
  %v105 = vsel %vm97, 1, 0
  %v106 = vsel %vm98, 1, 0
  %v107 = vsel %vm99, 1, 0
  %vm108 = vcmp.eq.s32.totalorder %v105, 1
  %vm109 = vcmp.eq.s32.totalorder %v106, 1
  %vm110 = vcmp.eq.s32.totalorder %v107, 1
  %vm111 = vmand %vm104, %vm108
  %vm112 = vmand %vm104, %vm109
  %vm113 = vmand %vm104, %vm110
  %v114 = vadd.s32 %v19, 32
  %115 = vset.pattern.permute.xlu0 1
  %116 = vperm.xlu0 %115, %v114
  %v117 = vpop.permute.xlu0 %116
  %vm118 = vcmp.eq.s32.totalorder %v117, %v16
  %vm119 = vmor %vm87, %vm118
  %v120 = vadd.s32 %v25, 35
  %121 = vset.pattern.permute.xlu0 1
  %122 = vperm.xlu0 %121, %v120
  %v123 = vpop.permute.xlu0 %122
  %vm124 = vcmp.eq.s32.totalorder %v123, %v16
  %vm125 = vmor %vm119, %vm124
  %v126 = vadd.s32 %v33, 38
  %127 = vset.pattern.permute.xlu0 1
  %128 = vperm.xlu0 %127, %v126
  %v129 = vpop.permute.xlu0 %128
  %vm130 = vcmp.eq.s32.totalorder %v129, %v16
  %vm131 = vmor %vm125, %vm130
  %v132 = vadd.s32 %v41, 41
  %133 = vset.pattern.permute.xlu0 1
  %134 = vperm.xlu0 %133, %v132
  %v135 = vpop.permute.xlu0 %134
  %vm136 = vcmp.eq.s32.totalorder %v135, %v16
  %vm137 = vmor %vm131, %vm136
  %v138 = vadd.s32 %v49, 45
  %139 = vset.pattern.permute.xlu0 1
  %140 = vperm.xlu0 %139, %v138
  %v141 = vpop.permute.xlu0 %140
  %vm142 = vcmp.eq.s32.totalorder %v141, %v16
  %vm143 = vmor %vm137, %vm142
  %v144 = vadd.s32 %v57, 51
  %145 = vset.pattern.permute.xlu0 1
  %146 = vperm.xlu0 %145, %v144
  %v147 = vpop.permute.xlu0 %146
  %vm148 = vcmp.eq.s32.totalorder %v147, %v16
  %vm149 = vmor %vm143, %vm148
  %v150 = vadd.s32 %v65, 54
  %151 = vset.pattern.permute.xlu0 1
  %152 = vperm.xlu0 %151, %v150
  %v153 = vpop.permute.xlu0 %152
  %vm154 = vcmp.eq.s32.totalorder %v153, %v16
  %vm155 = vmor %vm149, %vm154
  %v156 = vadd.s32 %v73, 57
  %157 = vset.pattern.permute.xlu0 1
  %158 = vperm.xlu0 %157, %v156
  %v159 = vpop.permute.xlu0 %158
  %vm160 = vcmp.eq.s32.totalorder %v159, %v16
  %vm161 = vmor %vm155, %vm160
  %v162 = vadd.s32 %v81, 60
  %163 = vset.pattern.permute.xlu0 1
  %164 = vperm.xlu0 %163, %v162
  %v165 = vpop.permute.xlu0 %164
  %vm166 = vcmp.eq.s32.totalorder %v165, %v16
  %vm167 = vmor %vm161, %vm166
  %vm168 = vcmp.ge.s32.totalorder %v16, 160
  %vm169 = vcmp.ge.s32.totalorder %v17, 160
  %vm170 = vcmp.ge.s32.totalorder %v18, 160
  %vm171 = vcmp.lt.s32.totalorder %v16, 192
  %vm172 = vcmp.lt.s32.totalorder %v17, 192
  %vm173 = vcmp.lt.s32.totalorder %v18, 192
  %vm174 = vmand %vm168, %vm171
  %vm175 = vmand %vm169, %vm172
  %vm176 = vmand %vm170, %vm173
  %177 = vset.pattern.permute.xlu0 1
  %178 = vperm.xlu0 %177, %v100
  %v179 = vpop.permute.xlu0 %178
  %vm180 = vcmp.eq.s32.totalorder %v179, 1
  %v181 = vsel %vm174, 1, 0
  %v182 = vsel %vm175, 1, 0
  %v183 = vsel %vm176, 1, 0
  %vm184 = vcmp.eq.s32.totalorder %v181, 1
  %vm185 = vcmp.eq.s32.totalorder %v182, 1
  %vm186 = vcmp.eq.s32.totalorder %v183, 1
  %vm187 = vmand %vm180, %vm184
  %vm188 = vmand %vm180, %vm185
  %vm189 = vmand %vm180, %vm186
  %vm190 = vmor %vm111, %vm187
  %vm191 = vmor %vm112, %vm188
  %vm192 = vmor %vm113, %vm189
  %v193 = vadd.s32 %v19, 64
  %194 = vset.pattern.permute.xlu0 2
  %195 = vperm.xlu0 %194, %v193
  %v196 = vpop.permute.xlu0 %195
  %vm197 = vcmp.eq.s32.totalorder %v196, %v16
  %vm198 = vmor %vm167, %vm197
  %v199 = vadd.s32 %v25, 67
  %200 = vset.pattern.permute.xlu0 2
  %201 = vperm.xlu0 %200, %v199
  %v202 = vpop.permute.xlu0 %201
  %vm203 = vcmp.eq.s32.totalorder %v202, %v16
  %vm204 = vmor %vm198, %vm203
  %v205 = vadd.s32 %v33, 70
  %206 = vset.pattern.permute.xlu0 2
  %207 = vperm.xlu0 %206, %v205
  %v208 = vpop.permute.xlu0 %207
  %vm209 = vcmp.eq.s32.totalorder %v208, %v16
  %vm210 = vmor %vm204, %vm209
  %v211 = vadd.s32 %v41, 73
  %212 = vset.pattern.permute.xlu0 2
  %213 = vperm.xlu0 %212, %v211
  %v214 = vpop.permute.xlu0 %213
  %vm215 = vcmp.eq.s32.totalorder %v214, %v16
  %vm216 = vmor %vm210, %vm215
  %v217 = vadd.s32 %v49, 77
  %218 = vset.pattern.permute.xlu0 2
  %219 = vperm.xlu0 %218, %v217
  %v220 = vpop.permute.xlu0 %219
  %vm221 = vcmp.eq.s32.totalorder %v220, %v16
  %vm222 = vmor %vm216, %vm221
  %v223 = vadd.s32 %v57, 83
  %224 = vset.pattern.permute.xlu0 2
  %225 = vperm.xlu0 %224, %v223
  %v226 = vpop.permute.xlu0 %225
  %vm227 = vcmp.eq.s32.totalorder %v226, %v16
  %vm228 = vmor %vm222, %vm227
  %v229 = vadd.s32 %v65, 86
  %230 = vset.pattern.permute.xlu0 2
  %231 = vperm.xlu0 %230, %v229
  %v232 = vpop.permute.xlu0 %231
  %vm233 = vcmp.eq.s32.totalorder %v232, %v16
  %vm234 = vmor %vm228, %vm233
  %v235 = vadd.s32 %v73, 89
  %236 = vset.pattern.permute.xlu0 2
  %237 = vperm.xlu0 %236, %v235
  %v238 = vpop.permute.xlu0 %237
  %vm239 = vcmp.eq.s32.totalorder %v238, %v16
  %vm240 = vmor %vm234, %vm239
  %v241 = vadd.s32 %v81, 92
  %242 = vset.pattern.permute.xlu0 2
  %243 = vperm.xlu0 %242, %v241
  %v244 = vpop.permute.xlu0 %243
  %vm245 = vcmp.eq.s32.totalorder %v244, %v16
  %vm246 = vmor %vm240, %vm245
  %vm247 = vcmp.ge.s32.totalorder %v16, 256
  %vm248 = vcmp.ge.s32.totalorder %v17, 256
  %vm249 = vcmp.ge.s32.totalorder %v18, 256
  %vm250 = vcmp.lt.s32.totalorder %v16, 288
  %vm251 = vcmp.lt.s32.totalorder %v17, 288
  %vm252 = vcmp.lt.s32.totalorder %v18, 288
  %vm253 = vmand %vm247, %vm250
  %vm254 = vmand %vm248, %vm251
  %vm255 = vmand %vm249, %vm252
  %256 = vset.pattern.permute.xlu0 2
  %257 = vperm.xlu0 %256, %v100
  %v258 = vpop.permute.xlu0 %257
  %vm259 = vcmp.eq.s32.totalorder %v258, 1
  %v260 = vsel %vm253, 1, 0
  %v261 = vsel %vm254, 1, 0
  %v262 = vsel %vm255, 1, 0
  %vm263 = vcmp.eq.s32.totalorder %v260, 1
  %vm264 = vcmp.eq.s32.totalorder %v261, 1
  %vm265 = vcmp.eq.s32.totalorder %v262, 1
  %vm266 = vmand %vm259, %vm263
  %vm267 = vmand %vm259, %vm264
  %vm268 = vmand %vm259, %vm265
  %vm269 = vmor %vm190, %vm266
  %vm270 = vmor %vm191, %vm267
  %vm271 = vmor %vm192, %vm268
  %v272 = vadd.s32 %v19, 96
  %273 = vset.pattern.permute.xlu0 3
  %274 = vperm.xlu0 %273, %v272
  %v275 = vpop.permute.xlu0 %274
  %vm276 = vcmp.eq.s32.totalorder %v275, %v16
  %vm277 = vmor %vm246, %vm276
  %v278 = vadd.s32 %v25, 99
  %279 = vset.pattern.permute.xlu0 3
  %280 = vperm.xlu0 %279, %v278
  %v281 = vpop.permute.xlu0 %280
  %vm282 = vcmp.eq.s32.totalorder %v281, %v16
  %vm283 = vmor %vm277, %vm282
  %v284 = vadd.s32 %v33, 102
  %285 = vset.pattern.permute.xlu0 3
  %286 = vperm.xlu0 %285, %v284
  %v287 = vpop.permute.xlu0 %286
  %vm288 = vcmp.eq.s32.totalorder %v287, %v16
  %vm289 = vmor %vm283, %vm288
  %v290 = vadd.s32 %v41, 105
  %291 = vset.pattern.permute.xlu0 3
  %292 = vperm.xlu0 %291, %v290
  %v293 = vpop.permute.xlu0 %292
  %vm294 = vcmp.eq.s32.totalorder %v293, %v16
  %vm295 = vmor %vm289, %vm294
  %v296 = vadd.s32 %v49, 109
  %297 = vset.pattern.permute.xlu0 3
  %298 = vperm.xlu0 %297, %v296
  %v299 = vpop.permute.xlu0 %298
  %vm300 = vcmp.eq.s32.totalorder %v299, %v16
  %vm301 = vmor %vm295, %vm300
  %v302 = vadd.s32 %v57, 115
  %303 = vset.pattern.permute.xlu0 3
  %304 = vperm.xlu0 %303, %v302
  %v305 = vpop.permute.xlu0 %304
  %vm306 = vcmp.eq.s32.totalorder %v305, %v16
  %vm307 = vmor %vm301, %vm306
  %v308 = vadd.s32 %v65, 118
  %309 = vset.pattern.permute.xlu0 3
  %310 = vperm.xlu0 %309, %v308
  %v311 = vpop.permute.xlu0 %310
  %vm312 = vcmp.eq.s32.totalorder %v311, %v16
  %vm313 = vmor %vm307, %vm312
  %v314 = vadd.s32 %v73, 121
  %315 = vset.pattern.permute.xlu0 3
  %316 = vperm.xlu0 %315, %v314
  %v317 = vpop.permute.xlu0 %316
  %vm318 = vcmp.eq.s32.totalorder %v317, %v16
  %vm319 = vmor %vm313, %vm318
  %v320 = vadd.s32 %v81, 124
  %321 = vset.pattern.permute.xlu0 3
  %322 = vperm.xlu0 %321, %v320
  %v323 = vpop.permute.xlu0 %322
  %vm324 = vcmp.eq.s32.totalorder %v323, %v16
  %vm325 = vmor %vm319, %vm324
  %vm326 = vcmp.ge.s32.totalorder %v16, 352
  %vm327 = vcmp.ge.s32.totalorder %v17, 352
  %vm328 = vcmp.ge.s32.totalorder %v18, 352
  %vm329 = vcmp.lt.s32.totalorder %v16, 384
  %vm330 = vcmp.lt.s32.totalorder %v17, 384
  %vm331 = vcmp.lt.s32.totalorder %v18, 384
  %vm332 = vmand %vm326, %vm329
  %vm333 = vmand %vm327, %vm330
  %vm334 = vmand %vm328, %vm331
  %335 = vset.pattern.permute.xlu0 3
  %336 = vperm.xlu0 %335, %v100
  %v337 = vpop.permute.xlu0 %336
  %vm338 = vcmp.eq.s32.totalorder %v337, 1
  %v339 = vsel %vm332, 1, 0
  %v340 = vsel %vm333, 1, 0
  %v341 = vsel %vm334, 1, 0
  %vm342 = vcmp.eq.s32.totalorder %v339, 1
  %vm343 = vcmp.eq.s32.totalorder %v340, 1
  %vm344 = vcmp.eq.s32.totalorder %v341, 1
  %vm345 = vmand %vm338, %vm342
  %vm346 = vmand %vm338, %vm343
  %vm347 = vmand %vm338, %vm344
  %vm348 = vmor %vm269, %vm345
  %vm349 = vmor %vm270, %vm346
  %vm350 = vmor %vm271, %vm347
  %v351 = vsel %vm325, 1, 0
  %v352 = vcvt.s32.f32 %v351
  %v353 = vld [vmem:[%s1] sm:$0xff]
  %v354 = vld [vmem:[%s1 + $0x8] sm:$0xff]
  %v355 = vld [vmem:[%s1 + $0x10] sm:$0xff]
  %v356 = vld [vmem:[%s1 + $0x18] sm:$0xff]
  %v357 = vld [vmem:[%s1 + $0x20] sm:$0xff]
  %v358 = vld [vmem:[%s1 + $0x28] sm:$0xff]
  %v359 = vld [vmem:[%s1 + $0x30] sm:$0xff]
  %v360 = vld [vmem:[%s1 + $0x38] sm:$0xff]
  %v361 = vld [vmem:[%s1 + $0x40] sm:$0xff]
  %v362 = vld [vmem:[%s1 + $0x48] sm:$0xff]
  %v363 = vld [vmem:[%s1 + $0x50] sm:$0xff]
  %v364 = vld [vmem:[%s1 + $0x58] sm:$0xff]
  %v365 = vld [vmem:[%s1 + $0x60] sm:$0xff]
  %v366 = vld [vmem:[%s1 + $0x68] sm:$0xff]
  %v367 = vld [vmem:[%s1 + $0x70] sm:$0xff]
  %v368 = vld [vmem:[%s1 + $0x78] sm:$0xff]
  %v369 = vld [vmem:[%s1 + $0x80] sm:$0xff]
  %v370 = vld [vmem:[%s1 + $0x88] sm:$0xff]
  %v371 = vld [vmem:[%s1 + $0x90] sm:$0xff]
  %v372 = vld [vmem:[%s1 + $0x98] sm:$0xff]
  %v373 = vld [vmem:[%s1 + $0xa0] sm:$0xff]
  %v374 = vld [vmem:[%s1 + $0xa8] sm:$0xff]
  %v375 = vld [vmem:[%s1 + $0xb0] sm:$0xff]
  %v376 = vld [vmem:[%s1 + $0xb8] sm:$0xff]
  %v377 = vld [vmem:[%s1 + $0xc0] sm:$0xff]
  %v378 = vld [vmem:[%s1 + $0xc8] sm:$0xff]
  %v379 = vld [vmem:[%s1 + $0xd0] sm:$0xff]
  %v380 = vld [vmem:[%s1 + $0xd8] sm:$0xff]
  %v381 = vld [vmem:[%s1 + $0xe0] sm:$0xff]
  %v382 = vld [vmem:[%s1 + $0xe8] sm:$0xff]
  %v383 = vld [vmem:[%s1 + $0xf0] sm:$0xff]
  %v384 = vld [vmem:[%s1 + $0xf8] sm:$0xff]
  %v385 = vld [vmem:[%s1 + $0x100] sm:$0xff]
  %v386 = vld [vmem:[%s1 + $0x108] sm:$0xff]
  %v387 = vld [vmem:[%s1 + $0x110] sm:$0xff]
  %v388 = vld [vmem:[%s1 + $0x118] sm:$0xff]
  %v389 = vld [vmem:[%s1 + $0x120] sm:$0xff]
  %v390 = vld [vmem:[%s1 + $0x128] sm:$0xff]
  %v391 = vld [vmem:[%s1 + $0x130] sm:$0xff]
  %v392 = vld [vmem:[%s1 + $0x138] sm:$0xff]
  %v393 = vld [vmem:[%s1 + $0x140] sm:$0xff]
  %v394 = vld [vmem:[%s1 + $0x148] sm:$0xff]
  %v395 = vld [vmem:[%s1 + $0x150] sm:$0xff]
  %v396 = vld [vmem:[%s1 + $0x158] sm:$0xff]
  %v397 = vld [vmem:[%s1 + $0x160] sm:$0xff]
  %v398 = vld [vmem:[%s1 + $0x168] sm:$0xff]
  %v399 = vld [vmem:[%s1 + $0x170] sm:$0xff]
  %v400 = vld [vmem:[%s1 + $0x178] sm:$0xff]
  %v401 = vld [vmem:[%s2] ss:$2 sm:$0x7]
  %v403 = vlaneseq
  %v404 = vshrl.u32 %v403, 7
  %v405 = vsub.s32 0, %v404
  %v406 = vrot.slane %v401, %v405
  %v407 = vlaneseq
  %v408 = vshrl.u32 %v407, 7
  %v409 = vsub.s32 1, %v408
  %v410 = vrot.slane %v401, %v409
  %v411 = vlaneseq
  %v412 = vshrl.u32 %v411, 7
  %v413 = vsub.s32 2, %v412
  %v414 = vrot.slane %v401, %v413
  %418 = vmatprep.subr.mxu0 %v354
  %419 = vmatpush1.msra.mxu0 %v353
  %420 = vmatprep.subr.mxu0 %v357
  %421 = vmatpush1.msra.mxu0 %v356
  %422 = vmatprep.subr.mxu0 %v360
  %423 = vmatpush1.msra.mxu0 %v359
  %424 = vmatprep.subr.mxu0 %v363
  %425 = vmatpush1.msra.mxu0 %v362
  %426 = vmatprep.subr.mxu0 %v366
  %427 = vmatpush1.msra.mxu0 %v365
  %428 = vmatprep.subr.mxu0 %v369
  %429 = vmatpush1.msra.mxu0 %v368
  %430 = vmatprep.subr.mxu0 %v372
  %431 = vmatpush1.msra.mxu0 %v371
  %432 = vmatprep.subr.mxu0 %v375
  %433 = vmatpush1.msra.mxu0 %v374
  %434 = vmatprep.subr.mxu0 %v378
  %435 = vmatpush1.msra.mxu0 %v377
  %436 = vmatprep.subr.mxu0 %v381
  %437 = vmatpush1.msra.mxu0 %v380
  %438 = vmatprep.subr.mxu0 %v384
  %439 = vmatpush1.msra.mxu0 %v383
  %440 = vmatprep.subr.mxu0 %v387
  %441 = vmatpush1.msra.mxu0 %v386
  %442 = vmatprep.subr.mxu0 %v390
  %443 = vmatpush1.msra.mxu0 %v389
  %444 = vmatprep.subr.mxu0 %v393
  %445 = vmatpush1.msra.mxu0 %v392
  %446 = vmatprep.subr.mxu0 %v396
  %447 = vmatpush1.msra.mxu0 %v395
  %448 = vmatprep.subr.mxu0 %v399
  %449 = vmatpush1.msra.mxu0 %v398
  %450 = vmatprep.subr.mxu0 0.0
  %451 = vmatpush1.msra.mxu0 0.0
  %452 = vmatprep.subr.mxu0 0.0
  %453 = vmatpush1.msra.mxu0 0.0
  %454 = vmatprep.subr.mxu0 0.0
  %455 = vmatpush1.msra.mxu0 0.0
  %456 = vmatprep.subr.mxu0 0.0
  %457 = vmatpush1.msra.mxu0 0.0
  %458 = vmatprep.subr.mxu0 0.0
  %459 = vmatpush1.msra.mxu0 0.0
  %460 = vmatprep.subr.mxu0 0.0
  %461 = vmatpush1.msra.mxu0 0.0
  %462 = vmatprep.subr.mxu0 0.0
  %463 = vmatpush1.msra.mxu0 0.0
  %464 = vmatprep.subr.mxu0 0.0
  %465 = vmatpush1.msra.mxu0 0.0
  %466 = vmatprep.subr.mxu0 0.0
  %467 = vmatpush1.msra.mxu0 0.0
  %468 = vmatprep.subr.mxu0 0.0
  %469 = vmatpush1.msra.mxu0 0.0
  %470 = vmatprep.subr.mxu0 0.0
  %471 = vmatpush1.msra.mxu0 0.0
  %472 = vmatprep.subr.mxu0 0.0
  %473 = vmatpush1.msra.mxu0 0.0
  %474 = vmatprep.subr.mxu0 0.0
  %475 = vmatpush1.msra.mxu0 0.0
  %476 = vmatprep.subr.mxu0 0.0
  %477 = vmatpush1.msra.mxu0 0.0
  %478 = vmatprep.subr.mxu0 0.0
  %479 = vmatpush1.msra.mxu0 0.0
  %480 = vmatprep.subr.mxu0 0.0
  %481 = vmatpush1.msra.mxu0 0.0
  %482 = vmatprep.mubr.f32.mxu0 0.0
  %483 = vmatmul.mubr.f32.gmra.mrb[0].mxu0 %v352
  %v484 = vpop.f32.mrb[0].mxu0
  %v485 = vadd.f32 %v406, %v484
  %v486 = vpop.f32.mrb[0].mxu0
  %v487 = vadd.f32 %v410, %v486
  %488 = vdwg.mxu0
  %489 = vmatprep.subr.mxu0 0.0
  %490 = vmatpush1.msra.mxu0 %v355
  %491 = vmatprep.subr.mxu0 0.0
  %492 = vmatpush1.msra.mxu0 %v358
  %493 = vmatprep.subr.mxu0 0.0
  %494 = vmatpush1.msra.mxu0 %v361
  %495 = vmatprep.subr.mxu0 0.0
  %496 = vmatpush1.msra.mxu0 %v364
  %497 = vmatprep.subr.mxu0 0.0
  %498 = vmatpush1.msra.mxu0 %v367
  %499 = vmatprep.subr.mxu0 0.0
  %500 = vmatpush1.msra.mxu0 %v370
  %501 = vmatprep.subr.mxu0 0.0
  %502 = vmatpush1.msra.mxu0 %v373
  %503 = vmatprep.subr.mxu0 0.0
  %504 = vmatpush1.msra.mxu0 %v376
  %505 = vmatprep.subr.mxu0 0.0
  %506 = vmatpush1.msra.mxu0 %v379
  %507 = vmatprep.subr.mxu0 0.0
  %508 = vmatpush1.msra.mxu0 %v382
  %509 = vmatprep.subr.mxu0 0.0
  %510 = vmatpush1.msra.mxu0 %v385
  %511 = vmatprep.subr.mxu0 0.0
  %512 = vmatpush1.msra.mxu0 %v388
  %513 = vmatprep.subr.mxu0 0.0
  %514 = vmatpush1.msra.mxu0 %v391
  %515 = vmatprep.subr.mxu0 0.0
  %516 = vmatpush1.msra.mxu0 %v394
  %517 = vmatprep.subr.mxu0 0.0
  %518 = vmatpush1.msra.mxu0 %v397
  %519 = vmatprep.subr.mxu0 0.0
  %520 = vmatpush1.msra.mxu0 %v400
  %521 = vmatprep.subr.mxu0 0.0
  %522 = vmatpush1.msra.mxu0 0.0
  %523 = vmatprep.subr.mxu0 0.0
  %524 = vmatpush1.msra.mxu0 0.0
  %525 = vmatprep.subr.mxu0 0.0
  %526 = vmatpush1.msra.mxu0 0.0
  %527 = vmatprep.subr.mxu0 0.0
  %528 = vmatpush1.msra.mxu0 0.0
  %529 = vmatprep.subr.mxu0 0.0
  %530 = vmatpush1.msra.mxu0 0.0
  %531 = vmatprep.subr.mxu0 0.0
  %532 = vmatpush1.msra.mxu0 0.0
  %533 = vmatprep.subr.mxu0 0.0
  %534 = vmatpush1.msra.mxu0 0.0
  %535 = vmatprep.subr.mxu0 0.0
  %536 = vmatpush1.msra.mxu0 0.0
  %537 = vmatprep.subr.mxu0 0.0
  %538 = vmatpush1.msra.mxu0 0.0
  %539 = vmatprep.subr.mxu0 0.0
  %540 = vmatpush1.msra.mxu0 0.0
  %541 = vmatprep.subr.mxu0 0.0
  %542 = vmatpush1.msra.mxu0 0.0
  %543 = vmatprep.subr.mxu0 0.0
  %544 = vmatpush1.msra.mxu0 0.0
  %545 = vmatprep.subr.mxu0 0.0
  %546 = vmatpush1.msra.mxu0 0.0
  %547 = vmatprep.subr.mxu0 0.0
  %548 = vmatpush1.msra.mxu0 0.0
  %549 = vmatprep.subr.mxu0 0.0
  %550 = vmatpush1.msra.mxu0 0.0
  %551 = vmatprep.subr.mxu0 0.0
  %552 = vmatpush1.msra.mxu0 0.0
  %553 = vmatprep.mubr.f32.mxu0 0.0
  %554 = vmatmul.mubr.f32.gmra.mrb[0].mxu0 %v352
  %v555 = vpop.f32.mrb[0].mxu0
  %v556 = vadd.f32 %v414, %v555
  %v557 = vpop.f32.mrb[0].mxu0
  %558 = vdwg.mxu0
  %s559 = scalar_lea.vmem %s2, 1
  %v560 = vld [vmem:[%s559] ss:$2 sm:$0x7]
  %v562 = vlaneseq
  %v563 = vshrl.u32 %v562, 7
  %v564 = vsub.s32 0, %v563
  %v565 = vrot.slane %v560, %v564
  %v566 = vlaneseq
  %v567 = vshrl.u32 %v566, 7
  %v568 = vsub.s32 1, %v567
  %v569 = vrot.slane %v560, %v568
  %v570 = vlaneseq
  %v571 = vshrl.u32 %v570, 7
  %v572 = vsub.s32 2, %v571
  %v573 = vrot.slane %v560, %v572
  %v577 = vsel %vm348, %v565, %v485
  %v578 = vsel %vm349, %v569, %v487
  %v579 = vsel %vm350, %v573, %v556
  %580 = vst [vmem:[%s3] sm:$0xff] %v577
  %581 = vst [vmem:[%s3 + $0x8] sm:$0xff] %v578
  %582 = vst [vmem:[%s3 + $0x10] sm:$0xff] %v579
  // Predicated region
  $region14: #{alchemy_embedding.1} parent=0 // pred_check
    _
  $region15: #{alchemy_embedding.1} parent=0 // pred_check_branch
    %584 = sbr.rel (0) target = $region17
  $region16: #{alchemy_embedding.1} parent=0 // pred_region
    _
  $region17: #{alchemy_embedding.1} parent=0 // pred_fallthru
    _
  // Predicated region
  $region18: #{alchemy_embedding.1} parent=0 // pred_check
    _
  $region19: #{alchemy_embedding.1} parent=0 // pred_check_branch
    %586 = sbr.rel (0) target = $region21
  $region20: #{alchemy_embedding.1} parent=0 // pred_region
    _
  $region21: #{alchemy_embedding.1} parent=0 // pred_fallthru
    _

</llo_original>
